<compile_context>
chip_gen: v7x
topology: tpu7x:2x2x1
jax: 0.10.0
libtpu: 0.0.40
codegen_flags: <defaults>
</compile_context>

<pallas_src>
import jax
import jax.numpy as jnp
from jax.experimental import pallas as pl
from jax.experimental.pallas import tpu as pltpu

IN_DIM = 4
HIDDEN = 128
HEAD_PAD = 128        # lane-dense fused head output width
DEFAULT_BLOCK_B = 512  # batch tile (multiple of 256 preferred on v6e/v7x)


def _round_up(n, m):
    return ((n + m - 1) // m) * m


def actor_critic_kernel(x_ref, w1_ref, b1_ref, wh_ref, bh_ref, out_ref):
    # x_ref: [TB, 4]   w1_ref: [4, 128]   b1_ref: [1, 128]
    # wh_ref: [128, 128] (col0 = Wa1-Wa0 diff*-1 ... see wrapper), bh_ref: [1, 128]
    # out_ref: [TB, 128]  (col0=p0, col1=p1, col2=value, rest=padding)
    x = x_ref[...]

    # fc1 + ReLU (MXU matmul, f32 accumulation; K=4 -> effectively free)
    h = jnp.dot(x, w1_ref[...], preferred_element_type=jnp.float32)
    h = jnp.maximum(h + b1_ref[...], 0.0)                       # [TB, 128]

    # Fused heads: one lane-dense matmul for actor(+diff) and critic columns.
    z = jnp.dot(h, wh_ref[...], preferred_element_type=jnp.float32)
    z = z + bh_ref[...]                                         # [TB, 128]

    # 2-class softmax via sigmoid of the logit differences (baked into wh):
    #   lane 0: sigmoid(l0 - l1) = p0,  lane 1: sigmoid(l1 - l0) = p1
    # lane 2 (critic value) and padding lanes pass through unchanged.
    sig = 1.0 / (1.0 + jnp.exp(-z))                             # EUP + VPU
    lane = jax.lax.broadcasted_iota(jnp.int32, z.shape, dimension=1)
    out_ref[...] = jnp.where(lane < 2, sig, z)


def actor_critic_forward(x, params, *, block_b=DEFAULT_BLOCK_B):
    """x: [B, 4] float32. params: dict of pre-transposed ([in, out]) weights."""
    B = x.shape[0]

    # Batch tile: at least B rounded up to a sublane multiple, capped at block_b.
    TB = min(block_b, _round_up(B, 8))
    B_pad = _round_up(B, TB)
    nb = B_pad // TB
    x_pad = jnp.pad(x, ((0, B_pad - B), (0, 0))) if B_pad != B else x

    w1, b1 = params["w1"], params["b1"]   # [4,128], [1,128]
    wa, ba = params["wa"], params["ba"]   # [128,2], [1,2]
    wc, bc = params["wc"], params["bc"]   # [128,1], [1,1]

    # Build the fused, 128-lane-padded head weight/bias.
    #   col 0: Wa[:,0]-Wa[:,1]  (logit diff l0-l1)   -> sigmoid -> p0
    #   col 1: Wa[:,1]-Wa[:,0]  (logit diff l1-l0)   -> sigmoid -> p1
    #   col 2: Wc[:,0]                                -> value
    wh = jnp.zeros((HIDDEN, HEAD_PAD), jnp.float32)
    wh = wh.at[:, 0:1].set(wa[:, 0:1] - wa[:, 1:2])
    wh = wh.at[:, 1:2].set(wa[:, 1:2] - wa[:, 0:1])
    wh = wh.at[:, 2:3].set(wc)
    bh = jnp.zeros((1, HEAD_PAD), jnp.float32)
    bh = bh.at[:, 0].set(ba[:, 0] - ba[:, 1])
    bh = bh.at[:, 1].set(ba[:, 1] - ba[:, 0])
    bh = bh.at[:, 2].set(bc[:, 0])

    rep = lambda shape: pl.BlockSpec(shape, lambda i: (0, 0))   # replicated weights

    slab = pl.pallas_call(
        actor_critic_kernel,
        out_shape=jax.ShapeDtypeStruct((B_pad, HEAD_PAD), jnp.float32),
        grid=(nb,),
        in_specs=[
            pl.BlockSpec((TB, IN_DIM), lambda i: (i, 0)),        # x tile
            rep(w1.shape), rep(b1.shape),
            rep(wh.shape), rep(bh.shape),
        ],
        out_specs=pl.BlockSpec((TB, HEAD_PAD), lambda i: (i, 0)),
        compiler_params=pltpu.CompilerParams(
            dimension_semantics=("parallel",)),
    )(x_pad, w1, b1, wh, bh)

    probs = slab[:B, 0:2]
    values = slab[:B, 2:3]
    return probs, values


def init_params(key):
    """Deterministic init matching the module's shapes (fc1: 4->128,
    actor: 128->2, critic: 128->1). Weights stored as [in, out]."""
    k1, k2, k3, k4, k5, k6 = jax.random.split(key, 6)

    def uniform(k, shape, fan_in):
        bound = 1.0 / jnp.sqrt(fan_in)
        return jax.random.uniform(k, shape, jnp.float32, -bound, bound)

    return {
        "w1": uniform(k1, (4, 128), 4.0),
        "b1": uniform(k2, (1, 128), 4.0),
        "wa": uniform(k3, (128, 2), 128.0),
        "ba": uniform(k4, (1, 2), 128.0),
        "wc": uniform(k5, (128, 1), 128.0),
        "bc": uniform(k6, (1, 1), 128.0),
    }


def reference_forward(x, p):
    h = jnp.maximum(x @ p["w1"] + p["b1"], 0.0)
    logits = h @ p["wa"] + p["ba"]
    probs = jax.nn.softmax(logits, axis=-1)
    values = h @ p["wc"] + p["bc"]
    return probs, values


if __name__ == "__main__":
    key = jax.random.PRNGKey(0)
    kx, kx2, kp = jax.random.split(key, 3)
    params = init_params(kp)

    # Small batch (matches the module's nn.Linear(4, ...) input).
    B = 8
    x = jax.random.normal(kx, (B, 4), dtype=jnp.float32)
    probs, values = actor_critic_forward(x, params)
    jax.block_until_ready((probs, values))

    ref_probs, ref_values = reference_forward(x, params)
    assert probs.shape == (B, 2) and values.shape == (B, 1)
    assert jnp.allclose(probs, ref_probs, atol=1e-5, rtol=1e-5)
    assert jnp.allclose(values, ref_values, atol=1e-5, rtol=1e-5)
    assert jnp.allclose(jnp.sum(probs, axis=-1), 1.0, atol=1e-5)

    # Non-multiple batch + small tile to exercise padding and the multi-tile
    # (parallel) grid path.
    B2 = 50
    x2 = jax.random.normal(kx2, (B2, 4), dtype=jnp.float32)
    probs2, values2 = actor_critic_forward(x2, params, block_b=16)
    jax.block_until_ready((probs2, values2))

    ref_probs2, ref_values2 = reference_forward(x2, params)
    assert probs2.shape == (B2, 2) and values2.shape == (B2, 1)
    assert jnp.allclose(probs2, ref_probs2, atol=1e-5, rtol=1e-5)
    assert jnp.allclose(values2, ref_values2, atol=1e-5, rtol=1e-5)

    print("KERNEL_OK")
</pallas_src>

<mosaic_0001>
module attributes {stable_mosaic.version = 11 : i64} {
  func.func @actor_critic_kernel(%arg0: i32, %arg1: memref<8x4xf32, #tpu.memory_space<vmem>>, %arg2: memref<4x128xf32, #tpu.memory_space<vmem>>, %arg3: memref<1x128xf32, #tpu.memory_space<vmem>>, %arg4: memref<128x128xf32, #tpu.memory_space<vmem>>, %arg5: memref<1x128xf32, #tpu.memory_space<vmem>>, %arg6: memref<8x128xf32, #tpu.memory_space<vmem>>) attributes {dimension_semantics = [#tpu.dimension_semantics<parallel>], iteration_bounds = array<i64: 1>, scalar_prefetch = 0 : i64, scratch_operands = 0 : i64, tpu.core_type = #tpu.core_type<tc>, window_params = [{transform_indices = @transform_0, window_bounds = array<i64: 8, 4>}, {pipeline_mode = #tpu.pipeline_mode<synchronous>, transform_indices = @transform_1, window_bounds = array<i64: 4, 128>}, {pipeline_mode = #tpu.pipeline_mode<synchronous>, transform_indices = @transform_2, window_bounds = array<i64: 1, 128>}, {pipeline_mode = #tpu.pipeline_mode<synchronous>, transform_indices = @transform_3, window_bounds = array<i64: 128, 128>}, {pipeline_mode = #tpu.pipeline_mode<synchronous>, transform_indices = @transform_4, window_bounds = array<i64: 1, 128>}, {transform_indices = @transform_5, window_bounds = array<i64: 8, 128>}]} {
    %c0 = arith.constant 0 : index
    %c0_0 = arith.constant 0 : index
    %0 = vector.load %arg1[%c0, %c0_0] : memref<8x4xf32, #tpu.memory_space<vmem>>, vector<8x4xf32>
    %c0_1 = arith.constant 0 : index
    %c0_2 = arith.constant 0 : index
    %1 = vector.load %arg2[%c0_1, %c0_2] : memref<4x128xf32, #tpu.memory_space<vmem>>, vector<4x128xf32>
    %cst = arith.constant dense<0.000000e+00> : vector<8x128xf32>
    %2 = tpu.matmul %0, %1, %cst {dimension_numbers = #tpu.dot_dimension_numbers<[1], [0], [0], [1], [0, 0, 1, 1], [], []>} : vector<8x4xf32>, vector<4x128xf32>, vector<8x128xf32> -> vector<8x128xf32>
    %c0_3 = arith.constant 0 : index
    %c0_4 = arith.constant 0 : index
    %3 = vector.load %arg3[%c0_3, %c0_4] : memref<1x128xf32, #tpu.memory_space<vmem>>, vector<1x128xf32>
    %4 = vector.broadcast %3 : vector<1x128xf32> to vector<8x128xf32>
    %5 = arith.addf %2, %4 : vector<8x128xf32>
    %cst_5 = arith.constant 0.000000e+00 : f32
    %6 = vector.broadcast %cst_5 : f32 to vector<8x128xf32>
    %7 = arith.maximumf %5, %6 : vector<8x128xf32>
    %c0_6 = arith.constant 0 : index
    %c0_7 = arith.constant 0 : index
    %8 = vector.load %arg4[%c0_6, %c0_7] : memref<128x128xf32, #tpu.memory_space<vmem>>, vector<128x128xf32>
    %cst_8 = arith.constant dense<0.000000e+00> : vector<8x128xf32>
    %9 = tpu.matmul %7, %8, %cst_8 {dimension_numbers = #tpu.dot_dimension_numbers<[1], [0], [0], [1], [0, 0, 1, 1], [], []>} : vector<8x128xf32>, vector<128x128xf32>, vector<8x128xf32> -> vector<8x128xf32>
    %c0_9 = arith.constant 0 : index
    %c0_10 = arith.constant 0 : index
    %10 = vector.load %arg5[%c0_9, %c0_10] : memref<1x128xf32, #tpu.memory_space<vmem>>, vector<1x128xf32>
    %11 = vector.broadcast %10 : vector<1x128xf32> to vector<8x128xf32>
    %12 = arith.addf %9, %11 : vector<8x128xf32>
    %cst_11 = arith.constant 0.000000e+00 : f32
    %13 = vector.broadcast %cst_11 : f32 to vector<8x128xf32>
    %14 = arith.subf %13, %12 : vector<8x128xf32>
    %15 = math.exp %14 : vector<8x128xf32>
    %cst_12 = arith.constant 1.000000e+00 : f32
    %16 = vector.broadcast %cst_12 : f32 to vector<8x128xf32>
    %17 = arith.addf %16, %15 : vector<8x128xf32>
    %cst_13 = arith.constant 1.000000e+00 : f32
    %18 = vector.broadcast %cst_13 : f32 to vector<8x128xf32>
    %19 = arith.divf %18, %17 : vector<8x128xf32>
    %20 = tpu.iota {dimensions = array<i32: 1>} : vector<8x128xi32>
    %c2_i32 = arith.constant 2 : i32
    %21 = vector.broadcast %c2_i32 : i32 to vector<8x128xi32>
    %22 = arith.cmpi slt, %20, %21 : vector<8x128xi32>
    %23 = arith.select %22, %19, %12 : vector<8x128xi1>, vector<8x128xf32>
    %c0_14 = arith.constant 0 : index
    %c0_15 = arith.constant 0 : index
    %24 = vector.load %arg6[%c0_14, %c0_15] : memref<8x128xf32, #tpu.memory_space<vmem>>, vector<8x128xf32>
    tpu.vector_store %arg6[%c0_14, %c0_15], %23 {strides = array<i32>} : memref<8x128xf32, #tpu.memory_space<vmem>>, vector<8x128xf32>,
    return
  }
  func.func @transform_0(%arg0: i32) -> (i32, i32) {
    %c0_i32 = arith.constant 0 : i32
    %c0_i32_0 = arith.constant 0 : i32
    return %arg0, %c0_i32 : i32, i32
  }
  func.func @transform_1(%arg0: i32) -> (i32, i32) {
    %c0_i32 = arith.constant 0 : i32
    %c0_i32_0 = arith.constant 0 : i32
    %c0_i32_1 = arith.constant 0 : i32
    return %c0_i32, %c0_i32_0 : i32, i32
  }
  func.func @transform_2(%arg0: i32) -> (i32, i32) {
    %c0_i32 = arith.constant 0 : i32
    %c0_i32_0 = arith.constant 0 : i32
    %c0_i32_1 = arith.constant 0 : i32
    return %c0_i32, %c0_i32_0 : i32, i32
  }
  func.func @transform_3(%arg0: i32) -> (i32, i32) {
    %c0_i32 = arith.constant 0 : i32
    %c0_i32_0 = arith.constant 0 : i32
    %c0_i32_1 = arith.constant 0 : i32
    return %c0_i32, %c0_i32_0 : i32, i32
  }
  func.func @transform_4(%arg0: i32) -> (i32, i32) {
    %c0_i32 = arith.constant 0 : i32
    %c0_i32_0 = arith.constant 0 : i32
    %c0_i32_1 = arith.constant 0 : i32
    return %c0_i32, %c0_i32_0 : i32, i32
  }
  func.func @transform_5(%arg0: i32) -> (i32, i32) {
    %c0_i32 = arith.constant 0 : i32
    %c0_i32_0 = arith.constant 0 : i32
    return %arg0, %c0_i32 : i32, i32
  }
}

</mosaic_0001>

<llo_original>
// kernel: tpu_custom_call.1
$region0: #{tpu_custom_call.1}
  #allocation0 [shape = 'u32[]', space=smem, size = 0x4, offset = 0x4, fixed_abs, tag = 'smem constant byte address 0x4 - core index']
  #allocation1 [shape = 'u32[144,128]{1,0:T(1,128)}', space=vmem, size = 0x12000, scoped, tag = 'internal scratch']
  %s0 = inlined_call_operand.vmem [shape: f32[8,4], index: 0, kind: input, shape index: {}]
  %s1 = inlined_call_operand.vmem [shape: f32[4,128], index: 1, kind: input, shape index: {}]
  %s2 = inlined_call_operand.vmem [shape: f32[1,128], index: 2, kind: input, shape index: {}]
  %s3 = inlined_call_operand.hbm [shape: f32[128,128], index: 3, kind: input, shape index: {}]
  %s4 = inlined_call_operand.vmem [shape: f32[1,128], index: 4, kind: input, shape index: {}]
  %s5 = inlined_call_operand.hbm [shape: f32[8,128], index: 5, kind: output, shape index: {}]
  %s6 = sld [smem:[#allocation0]]
  $region34: #{tpu_custom_call.1} parent=0
    _
  %s8 = ssub.s32 1, %s6
  %s9 = scalar_select 0, %s8, %s6
  $region1: #{tpu_custom_call.1} parent=0
    #allocation2 [shape = 'u8[65536]{0}', space=vmem, size = 0x10000, scoped, tag = 'input window, operand 3, single buffered']
    #allocation3 [shape = 's32[1]{0}', space=sflag, size = 0x4, scoped, tag = 'scoped memory for tpu_custom_call.1']
    #allocation4 [shape = 's32[1]{0}', space=sflag, size = 0x4, scoped, tag = 'scoped memory for tpu_custom_call.1']
    #allocation5 [shape = 'u8[4096]{0}', space=vmem, size = 0x1000, scoped, tag = 'output window, operand 0, single buffered']
    %10 = vsyncpa [#allocation3], 0
    %11 = vsyncpa [#allocation4], 0
    // Predicated region
    $region2: #{tpu_custom_call.1} parent=1 // pred_check
      _
    $region3: #{tpu_custom_call.1} parent=1 // pred_check_branch
      %13 = sbr.rel (0) target = $region5
    $region4: #{tpu_custom_call.1} parent=1 // pred_region
      _
    $region5: #{tpu_custom_call.1} parent=1 // pred_fallthru
      _
    // Predicated region
    $region6: #{tpu_custom_call.1} parent=1 // pred_check
      _
    $region7: #{tpu_custom_call.1} parent=1 // pred_check_branch
      %15 = sbr.rel (0) target = $region9
    $region8: #{tpu_custom_call.1} parent=1 // pred_region
      _
    $region9: #{tpu_custom_call.1} parent=1 // pred_fallthru
      _
    // Predicated region
    $region10: #{tpu_custom_call.1} parent=1 // pred_check
      _
    $region11: #{tpu_custom_call.1} parent=1 // pred_check_branch
      %17 = sbr.rel (0) target = $region13
    $region12: #{tpu_custom_call.1} parent=1 // pred_region
      _
    $region13: #{tpu_custom_call.1} parent=1 // pred_fallthru
      _
    // Predicated region
    $region14: #{tpu_custom_call.1} parent=1 // pred_check
      _
    $region15: #{tpu_custom_call.1} parent=1 // pred_check_branch
      %19 = sbr.rel (0) target = $region17
    $region16: #{tpu_custom_call.1} parent=1 // pred_region
      %s21 = ssub.s32 2048, 2048
      %22 = vsyncadd [#allocation3], %s21
      %s23 = sshll.u32 [#allocation2], 4
      %s24 = int_to_ptr.vmem [resolvable:$true] %s23
      %29 = dma.hbm_to_vmem [thread:$0]  %s3, 2048, %s24, [#allocation3], 128, 128, 8
    $region17: #{tpu_custom_call.1} parent=1 // pred_fallthru
      _
    // Predicated region
    $region18: #{tpu_custom_call.1} parent=1 // pred_check
      _
    $region19: #{tpu_custom_call.1} parent=1 // pred_check_branch
      %31 = sbr.rel (0) target = $region21
    $region20: #{tpu_custom_call.1} parent=1 // pred_region
      _
    $region21: #{tpu_custom_call.1} parent=1 // pred_fallthru
      _
    // Predicated region
    $region22: #{tpu_custom_call.1} parent=1 // pred_check
      _
    $region23: #{tpu_custom_call.1} parent=1 // pred_check_branch
      %33 = sbr.rel (0) target = $region25
    $region24: #{tpu_custom_call.1} parent=1 // pred_region
      %34 = dma.done [#allocation3], 2048
    $region25: #{tpu_custom_call.1} parent=1 // pred_fallthru
      _
    %v35 = vld [vmem:[%s0] sm:$0xff]
    %v36 = vld [vmem:[%s1] sm:$0xf]
    %v37 = vld [vmem:[%s2] sm:$0x1]
    %v39 = vlaneseq
    %v40 = vshrl.u32 %v39, 7
    %v41 = vsub.s32 0, %v40
    %v42 = vrot.slane %v37, %v41
    %vm44 = vcmask 31744
    %v46 = vsel %vm44, %v35, 0
    %vm48 = vcmask 1043456
    %v50 = vsel %vm48, %v36, 0
    %52 = vmatprep.subr.mxu0 0.0
    %53 = vmatpush1.msra.mxu0 %v50
    %54 = vmatprep.subr.mxu0 0.0
    %55 = vmatpush1.msra.mxu0 0.0
    %56 = vmatprep.subr.mxu0 0.0
    %57 = vmatpush1.msra.mxu0 0.0
    %58 = vmatprep.subr.mxu0 0.0
    %59 = vmatpush1.msra.mxu0 0.0
    %60 = vmatprep.subr.mxu0 0.0
    %61 = vmatpush1.msra.mxu0 0.0
    %62 = vmatprep.subr.mxu0 0.0
    %63 = vmatpush1.msra.mxu0 0.0
    %64 = vmatprep.subr.mxu0 0.0
    %65 = vmatpush1.msra.mxu0 0.0
    %66 = vmatprep.subr.mxu0 0.0
    %67 = vmatpush1.msra.mxu0 0.0
    %68 = vmatprep.subr.mxu0 0.0
    %69 = vmatpush1.msra.mxu0 0.0
    %70 = vmatprep.subr.mxu0 0.0
    %71 = vmatpush1.msra.mxu0 0.0
    %72 = vmatprep.subr.mxu0 0.0
    %73 = vmatpush1.msra.mxu0 0.0
    %74 = vmatprep.subr.mxu0 0.0
    %75 = vmatpush1.msra.mxu0 0.0
    %76 = vmatprep.subr.mxu0 0.0
    %77 = vmatpush1.msra.mxu0 0.0
    %78 = vmatprep.subr.mxu0 0.0
    %79 = vmatpush1.msra.mxu0 0.0
    %80 = vmatprep.subr.mxu0 0.0
    %81 = vmatpush1.msra.mxu0 0.0
    %82 = vmatprep.subr.mxu0 0.0
    %83 = vmatpush1.msra.mxu0 0.0
    %84 = vmatprep.subr.mxu0 0.0
    %85 = vmatpush1.msra.mxu0 0.0
    %86 = vmatprep.subr.mxu0 0.0
    %87 = vmatpush1.msra.mxu0 0.0
    %88 = vmatprep.subr.mxu0 0.0
    %89 = vmatpush1.msra.mxu0 0.0
    %90 = vmatprep.subr.mxu0 0.0
    %91 = vmatpush1.msra.mxu0 0.0
    %92 = vmatprep.subr.mxu0 0.0
    %93 = vmatpush1.msra.mxu0 0.0
    %94 = vmatprep.subr.mxu0 0.0
    %95 = vmatpush1.msra.mxu0 0.0
    %96 = vmatprep.subr.mxu0 0.0
    %97 = vmatpush1.msra.mxu0 0.0
    %98 = vmatprep.subr.mxu0 0.0
    %99 = vmatpush1.msra.mxu0 0.0
    %100 = vmatprep.subr.mxu0 0.0
    %101 = vmatpush1.msra.mxu0 0.0
    %102 = vmatprep.subr.mxu0 0.0
    %103 = vmatpush1.msra.mxu0 0.0
    %104 = vmatprep.subr.mxu0 0.0
    %105 = vmatpush1.msra.mxu0 0.0
    %106 = vmatprep.subr.mxu0 0.0
    %107 = vmatpush1.msra.mxu0 0.0
    %108 = vmatprep.subr.mxu0 0.0
    %109 = vmatpush1.msra.mxu0 0.0
    %110 = vmatprep.subr.mxu0 0.0
    %111 = vmatpush1.msra.mxu0 0.0
    %112 = vmatprep.subr.mxu0 0.0
    %113 = vmatpush1.msra.mxu0 0.0
    %114 = vmatprep.subr.mxu0 0.0
    %115 = vmatpush1.msra.mxu0 0.0
    %116 = vmatprep.mubr.f32.mxu0 0.0
    %117 = vmatmul.mubr.f32.gmra.mrb[0].mxu0 %v46
    %v118 = vpop.f32.mrb[0].mxu0
    %v119 = vadd.f32 %v42, %v118
    %v120 = vpop.f32.mrb[0].mxu0
    %121 = vdwg.mxu0
    %v122 = vmax.f32 %v119, 0.0
    %v123 = vld [vmem:[#allocation2] sm:$0xff]
    %v124 = vld [vmem:[#allocation2 + $0x8] sm:$0xff]
    %v125 = vld [vmem:[#allocation2 + $0x10] sm:$0xff]
    %v126 = vld [vmem:[#allocation2 + $0x18] sm:$0xff]
    %v127 = vld [vmem:[#allocation2 + $0x20] sm:$0xff]
    %v128 = vld [vmem:[#allocation2 + $0x28] sm:$0xff]
    %v129 = vld [vmem:[#allocation2 + $0x30] sm:$0xff]
    %v130 = vld [vmem:[#allocation2 + $0x38] sm:$0xff]
    %v131 = vld [vmem:[#allocation2 + $0x40] sm:$0xff]
    %v132 = vld [vmem:[#allocation2 + $0x48] sm:$0xff]
    %v133 = vld [vmem:[#allocation2 + $0x50] sm:$0xff]
    %v134 = vld [vmem:[#allocation2 + $0x58] sm:$0xff]
    %v135 = vld [vmem:[#allocation2 + $0x60] sm:$0xff]
    %v136 = vld [vmem:[#allocation2 + $0x68] sm:$0xff]
    %v137 = vld [vmem:[#allocation2 + $0x70] sm:$0xff]
    %v138 = vld [vmem:[#allocation2 + $0x78] sm:$0xff]
    %v139 = vld [vmem:[%s4] sm:$0x1]
    %v141 = vlaneseq
    %v142 = vshrl.u32 %v141, 7
    %v143 = vsub.s32 0, %v142
    %v144 = vrot.slane %v139, %v143
    %146 = vmatprep.subr.mxu0 0.0
    %147 = vmatpush1.msra.mxu0 %v123
    %148 = vmatprep.subr.mxu0 0.0
    %149 = vmatpush1.msra.mxu0 %v124
    %150 = vmatprep.subr.mxu0 0.0
    %151 = vmatpush1.msra.mxu0 %v125
    %152 = vmatprep.subr.mxu0 0.0
    %153 = vmatpush1.msra.mxu0 %v126
    %154 = vmatprep.subr.mxu0 0.0
    %155 = vmatpush1.msra.mxu0 %v127
    %156 = vmatprep.subr.mxu0 0.0
    %157 = vmatpush1.msra.mxu0 %v128
    %158 = vmatprep.subr.mxu0 0.0
    %159 = vmatpush1.msra.mxu0 %v129
    %160 = vmatprep.subr.mxu0 0.0
    %161 = vmatpush1.msra.mxu0 %v130
    %162 = vmatprep.subr.mxu0 0.0
    %163 = vmatpush1.msra.mxu0 %v131
    %164 = vmatprep.subr.mxu0 0.0
    %165 = vmatpush1.msra.mxu0 %v132
    %166 = vmatprep.subr.mxu0 0.0
    %167 = vmatpush1.msra.mxu0 %v133
    %168 = vmatprep.subr.mxu0 0.0
    %169 = vmatpush1.msra.mxu0 %v134
    %170 = vmatprep.subr.mxu0 0.0
    %171 = vmatpush1.msra.mxu0 %v135
    %172 = vmatprep.subr.mxu0 0.0
    %173 = vmatpush1.msra.mxu0 %v136
    %174 = vmatprep.subr.mxu0 0.0
    %175 = vmatpush1.msra.mxu0 %v137
    %176 = vmatprep.subr.mxu0 0.0
    %177 = vmatpush1.msra.mxu0 %v138
    %178 = vmatprep.subr.mxu0 0.0
    %179 = vmatpush1.msra.mxu0 0.0
    %180 = vmatprep.subr.mxu0 0.0
    %181 = vmatpush1.msra.mxu0 0.0
    %182 = vmatprep.subr.mxu0 0.0
    %183 = vmatpush1.msra.mxu0 0.0
    %184 = vmatprep.subr.mxu0 0.0
    %185 = vmatpush1.msra.mxu0 0.0
    %186 = vmatprep.subr.mxu0 0.0
    %187 = vmatpush1.msra.mxu0 0.0
    %188 = vmatprep.subr.mxu0 0.0
    %189 = vmatpush1.msra.mxu0 0.0
    %190 = vmatprep.subr.mxu0 0.0
    %191 = vmatpush1.msra.mxu0 0.0
    %192 = vmatprep.subr.mxu0 0.0
    %193 = vmatpush1.msra.mxu0 0.0
    %194 = vmatprep.subr.mxu0 0.0
    %195 = vmatpush1.msra.mxu0 0.0
    %196 = vmatprep.subr.mxu0 0.0
    %197 = vmatpush1.msra.mxu0 0.0
    %198 = vmatprep.subr.mxu0 0.0
    %199 = vmatpush1.msra.mxu0 0.0
    %200 = vmatprep.subr.mxu0 0.0
    %201 = vmatpush1.msra.mxu0 0.0
    %202 = vmatprep.subr.mxu0 0.0
    %203 = vmatpush1.msra.mxu0 0.0
    %204 = vmatprep.subr.mxu0 0.0
    %205 = vmatpush1.msra.mxu0 0.0
    %206 = vmatprep.subr.mxu0 0.0
    %207 = vmatpush1.msra.mxu0 0.0
    %208 = vmatprep.subr.mxu0 0.0
    %209 = vmatpush1.msra.mxu0 0.0
    %210 = vmatprep.mubr.f32.mxu0 0.0
    %211 = vmatmul.mubr.f32.gmra.mrb[0].mxu0 %v122
    %v212 = vpop.f32.mrb[0].mxu0
    %v213 = vadd.f32 %v144, %v212
    %v214 = vpop.f32.mrb[0].mxu0
    %215 = vdwg.mxu0
    %v216 = vsub.f32 0.0, %v213
    %v217 = vmul.f32 %v216, 1.442695
    %v218 = vpow.pop %v217
    %v219 = vadd.f32 %v218, 1.0
    %v220 = vrcp.pop %v219
    %v221 = vmul.f32 1.0, %v220
    %v222 = vlaneseq
    %v223 = vand.u32 %v222, 127
    %vm224 = vcmp.lt.s32.totalorder %v223, 2
    %v225 = vsel %vm224, %v221, %v213
    %226 = vst [vmem:[#allocation5] sm:$0xff] %v225
    // Predicated region
    $region26: #{tpu_custom_call.1} parent=1 // pred_check
      _
    $region27: #{tpu_custom_call.1} parent=1 // pred_check_branch
      %228 = sbr.rel (0) target = $region29
    $region28: #{tpu_custom_call.1} parent=1 // pred_region
      %s230 = ssub.s32 128, 128
      %231 = vsyncadd [#allocation4], %s230
      %s233 = sshll.u32 [#allocation5], 4
      %s234 = int_to_ptr.vmem [resolvable:$true] %s233
      %236 = dma.vmem_to_hbm [thread:$0]  %s234, 128, %s5, [#allocation4]
    $region29: #{tpu_custom_call.1} parent=1 // pred_fallthru
      _
    // Predicated region
    $region30: #{tpu_custom_call.1} parent=1 // pred_check
      _
    $region31: #{tpu_custom_call.1} parent=1 // pred_check_branch
      %238 = sbr.rel (0) target = $region33
    $region32: #{tpu_custom_call.1} parent=1 // pred_region
      %239 = dma.done [#allocation4], 128
    $region33: #{tpu_custom_call.1} parent=1 // pred_fallthru
      _
    %240 = vsyncpa [#allocation3], 1
    %241 = vsyncpa [#allocation4], 1

</llo_original>
